<compile_context>
chip_gen: v5e
topology: v5e:2x2
jax: 0.10.0
libtpu: 0.0.40
codegen_flags: <defaults>
</compile_context>

<pallas_src>
import jax
import jax.numpy as jnp
import numpy as np
from jax.experimental import pallas as pl
from jax.experimental.pallas import tpu as pltpu

EPS = 1e-5        # BatchNorm1d default eps
LEAK = 0.2        # LeakyReLU negative slope
PAD = 128         # every feature axis is padded to one 128-lane tile
VEC_ROWS = 8      # rows reserved per layer for (gamma, beta) or (bias) + padding
LAYER_ROWS = PAD + VEC_ROWS   # 136 rows per layer tile (multiple of 8)


# ----------------------------- kernel -----------------------------
def _batchnorm_fold(x, gamma, beta):
    """Train-mode BatchNorm1d with folded affine: out = (x - mean) * scale + beta.

    Two-pass (centered) variance for numerical robustness. Padding lanes stay
    exactly zero because gamma/beta are packed as zero there (scale -> 0).
    """
    inv_n = 1.0 / x.shape[0]
    mean = jnp.sum(x, axis=0, keepdims=True) * inv_n
    d = x - mean
    var = jnp.sum(d * d, axis=0, keepdims=True) * inv_n
    scale = gamma * jax.lax.rsqrt(var + EPS)          # (1,128)
    return d * scale + beta                           # 2 ops/elem on the batch tile


def _make_kernel(n_res, emb):
    """Generator forward for `n_res` Residual blocks, packed-parameter layout."""
    n_layers = n_res + 2

    def kernel(x_ref, p_hbm, out_ref, slab_ref, buf_ref, sem_ref):
        # --- kick off ALL per-layer parameter DMAs immediately (HBM -> VMEM);
        #     each layer below only waits on its own ~68 KiB tile, so the bulk of
        #     the parameter traffic overlaps compute. ---
        for j in range(n_layers):
            pltpu.make_async_copy(p_hbm.at[j], buf_ref.at[j], sem_ref.at[j]).start()

        # --- build the activation slab in VMEM: lanes [0:emb)=x, rest exactly 0
        #     (padding lanes MUST be zero: residual "concat" is an add). ---
        slab_ref[...] = jnp.zeros_like(slab_ref)
        slab_ref[:, 0:emb] = x_ref[...]
        data = slab_ref[...]

        h_act = None
        out_val = None
        for j in range(n_layers):
            pltpu.make_async_copy(p_hbm.at[j], buf_ref.at[j], sem_ref.at[j]).wait()
            w = buf_ref[j, 0:PAD, :]                       # (128, 128) padded weight
            vec = buf_ref[j, PAD:PAD + VEC_ROWS, :]        # aligned (8, 128) vector rows

            if j < n_res:
                # Residual block: relu(bn(fc(x))); fc bias dropped (cancels in BN).
                g, be = vec[0:1, :], vec[1:2, :]
                pre = jnp.dot(data, w, preferred_element_type=jnp.float32)
                h = jnp.maximum(_batchnorm_fold(pre, g, be), 0.0)
                data = data + h        # h is exactly zero outside its target lanes
            elif j == n_res:
                # Fused heads [cont_cond | cate_final]: one matmul, fused BN + LeakyReLU.
                g, be = vec[0:1, :], vec[1:2, :]
                head = jnp.dot(data, w, preferred_element_type=jnp.float32)
                h_act = _batchnorm_fold(head, g, be)
                h_act = jnp.maximum(h_act, LEAK * h_act)
                # h_act lanes: [0:n_cat)=cont_data, [n_cat:n_cat+data_dim)=cate branch
            else:
                # Fused final linears: output lanes already ordered [bcate | bcont | 0...]
                bo = vec[0:1, :]
                out_val = jnp.dot(h_act, w, preferred_element_type=jnp.float32) + bo

        # single lane-dense output slab: [ out_val (128) | h_act (128) ]
        out_ref[:, 0:PAD] = out_val
        out_ref[:, PAD:2 * PAD] = h_act

    return kernel


# ----------------------------- wrapper -----------------------------
def generator_forward(x, packed_params, n_res, data_dim, n_cat):
    B, emb = x.shape
    n_layers = packed_params.shape[0]
    kernel = _make_kernel(n_res, emb)
    vmem = pl.BlockSpec(memory_space=pltpu.MemorySpace.VMEM)
    res = pl.pallas_call(
        kernel,
        out_shape=jax.ShapeDtypeStruct((B, 2 * PAD), jnp.float32),
        in_specs=[vmem,                                   # x: tiny, auto-DMA'd
                  pl.BlockSpec(memory_space=pl.ANY)],      # params: stay in HBM
        out_specs=vmem,
        scratch_shapes=[
            pltpu.VMEM((B, PAD), jnp.float32),             # activation slab
            pltpu.VMEM((n_layers, LAYER_ROWS, PAD), jnp.float32),  # per-layer tiles
            pltpu.SemaphoreType.DMA((n_layers,)),
        ],
    )(x, packed_params)
    out = res[:, :data_dim]
    cont = res[:, PAD:PAD + n_cat]
    return out, cont


# ----------------------------- host-side parameter packing -----------------------------
def pack_params(params, embedding_dim, generator_dim, data_dim, n_cat, n_cont):
    """Fuse / permute / zero-pad the PyTorch-layout parameter list into one buffer.

    Layer tile layout (LAYER_ROWS x 128):
      rows [0:128)   : padded weight (rows permuted to the slab's lane layout)
      rows 128,129   : gamma, beta   (BN layers; fc bias dropped -- cancels in BN)
      row  128       : fused bias    (final-linear layer only)
    gamma/beta/bias are exactly zero on padding lanes (required for correctness).
    """
    n_res = len(generator_dim)
    dims = list(generator_dim)
    h_off = [embedding_dim + sum(dims[:i]) for i in range(n_res)]
    total_dim = embedding_dim + sum(dims)
    assert total_dim <= PAD and (n_cat + data_dim) <= PAD and data_dim <= PAD

    p = [np.asarray(a, np.float32) for a in params]
    layers = []

    def chunk_layout(j):
        # PyTorch row order of the input to layer j: [h_{j-1}, ..., h_0, x]
        order = [(h_off[t], dims[t]) for t in reversed(range(j))]
        order.append((0, embedding_dim))
        return order

    def place_w(W, j, col_off):
        Wp = np.zeros((PAD, PAD), np.float32)
        r = 0
        for off, width in chunk_layout(j):
            Wp[off:off + width, col_off:col_off + W.shape[1]] = W[r:r + width, :]
            r += width
        assert r == W.shape[0]
        return Wp

    def layer_block(Wp, vec_rows):
        blk = np.zeros((LAYER_ROWS, PAD), np.float32)
        blk[:PAD, :] = Wp
        for row, items in enumerate(vec_rows):
            for v, off in items:
                v = np.asarray(v, np.float32).reshape(-1)
                blk[PAD + row, off:off + v.shape[0]] = v
        return blk

    i = 0
    for j in range(n_res):
        W, _b, g, be = p[i], p[i + 1], p[i + 2], p[i + 3]   # fc bias dropped
        i += 4
        off = h_off[j]
        layers.append(layer_block(place_w(W, j, off), [[(g, off)], [(be, off)]]))

    (wcc, _bcc, gcc, becc, wcc2, bcc2,
     wcf, _bcf, gcf, becf, wcf2, bcf2) = p[i:i + 12]        # head biases dropped

    # fused heads: columns [0:n_cat)=cont_cond, [n_cat:n_cat+data_dim)=cate_final
    Wh = place_w(wcc, n_res, 0) + place_w(wcf, n_res, n_cat)
    layers.append(layer_block(Wh, [
        [(gcc, 0), (gcf, n_cat)],
        [(becc, 0), (becf, n_cat)],
    ]))

    # fused final linears; rows follow h_act layout [cont | cate], cols = [bcate | bcont]
    Wo = np.zeros((PAD, PAD), np.float32)
    Wo[n_cat:n_cat + data_dim, 0:data_dim - n_cont] = wcf2
    Wo[0:n_cat, data_dim - n_cont:data_dim] = wcc2
    layers.append(layer_block(Wo, [[(bcf2, 0), (bcc2, data_dim - n_cont)]]))

    packed = np.stack(layers, axis=0)
    assert packed.shape == (n_res + 2, LAYER_ROWS, PAD)
    return jnp.asarray(packed)


# ----------------------------- parameter init (PyTorch layout) -----------------------------
def init_params(key, embedding_dim, generator_dim, data_dim, n_cat, n_cont):
    """Deterministic PyTorch-Linear-style init; BN gamma=1, beta=0."""

    def lin(k, i, o):
        kw, kb = jax.random.split(k)
        bound = float(i) ** -0.5
        w = jax.random.uniform(kw, (i, o), jnp.float32, -bound, bound)
        b = jax.random.uniform(kb, (1, o), jnp.float32, -bound, bound)
        return w, b

    params = []
    dim = embedding_dim
    keys = jax.random.split(key, len(generator_dim) + 4)
    for k, item in zip(keys[: len(generator_dim)], generator_dim):
        w, b = lin(k, dim, item)
        params += [w, b, jnp.ones((1, item), jnp.float32), jnp.zeros((1, item), jnp.float32)]
        dim += item

    w, b = lin(keys[-4], dim, n_cat)                       # cont_cond + bn
    params += [w, b, jnp.ones((1, n_cat), jnp.float32), jnp.zeros((1, n_cat), jnp.float32)]
    w, b = lin(keys[-3], n_cat, n_cont)                    # cont_cond2
    params += [w, b]
    w, b = lin(keys[-2], dim, data_dim)                    # cate_final + bn2
    params += [w, b, jnp.ones((1, data_dim), jnp.float32), jnp.zeros((1, data_dim), jnp.float32)]
    w, b = lin(keys[-1], data_dim, data_dim - n_cont)      # cate_final2
    params += [w, b]
    return params


# ----------------------------- pure-JAX reference (PyTorch-faithful) -----------------------------
def reference_forward(x, params, n_res):
    def bn(v, g, be):
        m = jnp.mean(v, axis=0, keepdims=True)
        var = jnp.mean((v - m) ** 2, axis=0, keepdims=True)
        return (v - m) * jax.lax.rsqrt(var + EPS) * g + be

    p = list(params)
    i = 0
    data = x
    for _ in range(n_res):
        w, b, g, be = p[i], p[i + 1], p[i + 2], p[i + 3]
        i += 4
        h = jnp.maximum(bn(data @ w + b, g, be), 0.0)
        data = jnp.concatenate([h, data], axis=1)
    (wcc, bcc, gcc, becc, wcc2, bcc2, wcf, bcf, gcf, becf, wcf2, bcf2) = p[i:i + 12]
    cont = bn(data @ wcc + bcc, gcc, becc)
    cont = jnp.where(cont > 0, cont, LEAK * cont)
    bcont = cont @ wcc2 + bcc2
    bcate = bn(data @ wcf + bcf, gcf, becf)
    bcate = jnp.where(bcate > 0, bcate, LEAK * bcate)
    bcate = bcate @ wcf2 + bcf2
    return jnp.concatenate([bcate, bcont], axis=1), cont


# ----------------------------- main -----------------------------
if __name__ == "__main__":
    B = 8
    embedding_dim = 32
    generator_dim = (32, 32)
    data_dim = 24
    n_categories = 16            # semantic._n_categories
    n_continuous = 8             # semantic._n_continuous_columns

    key = jax.random.PRNGKey(0)
    kx, kp = jax.random.split(key)
    x = jax.random.normal(kx, (B, embedding_dim), jnp.float32)
    params = init_params(kp, embedding_dim, generator_dim, data_dim,
                         n_categories, n_continuous)
    packed = pack_params(params, embedding_dim, generator_dim, data_dim,
                         n_categories, n_continuous)

    out, cont = generator_forward(x, packed, len(generator_dim), data_dim, n_categories)
    jax.block_until_ready((out, cont))

    ref_out, ref_cont = reference_forward(x, params, len(generator_dim))
    assert out.shape == (B, data_dim) and cont.shape == (B, n_categories)
    assert jnp.allclose(out, ref_out, atol=1e-3, rtol=1e-3)
    assert jnp.allclose(cont, ref_cont, atol=1e-3, rtol=1e-3)

    print("KERNEL_OK")
</pallas_src>

<mosaic_0001>
module attributes {stable_mosaic.version = 11 : i64} {
  func.func @kernel(%arg0: memref<8x32xf32, #tpu.memory_space<vmem>>, %arg1: memref<4x136x128xf32, #tpu.memory_space<any>>, %arg2: memref<8x256xf32, #tpu.memory_space<vmem>>, %arg3: memref<8x128xf32, #tpu.memory_space<vmem>>, %arg4: memref<4x136x128xf32, #tpu.memory_space<vmem>>, %arg5: memref<4x!tpu.dma_semaphore, #tpu.memory_space<semaphore_mem>>) attributes {dimension_semantics = [], scalar_prefetch = 0 : i64, scratch_operands = 3 : i64, tpu.core_type = #tpu.core_type<tc>} {
    %c0_i32 = arith.constant 0 : i32
    %c0_i32_0 = arith.constant 0 : i32
    %c0_i32_1 = arith.constant 0 : i32
    %c0_i32_2 = arith.constant 0 : i32
    %c0_i32_3 = arith.constant 0 : i32
    %0 = tpu.memref_slice %arg1[%c0_i32, %c0_i32_2, %c0_i32_3] : memref<4x136x128xf32, #tpu.memory_space<any>> -> memref<1x136x128xf32, #tpu.memory_space<any>>
    %1 = tpu.memref_squeeze %0 : memref<1x136x128xf32, #tpu.memory_space<any>> -> memref<136x128xf32, #tpu.memory_space<any>>
    %c0_i32_4 = arith.constant 0 : i32
    %c0_i32_5 = arith.constant 0 : i32
    %2 = tpu.memref_slice %arg4[%c0_i32_0, %c0_i32_4, %c0_i32_5] : memref<4x136x128xf32, #tpu.memory_space<vmem>> -> memref<1x136x128xf32, #tpu.memory_space<vmem>>
    %3 = tpu.memref_squeeze %2 : memref<1x136x128xf32, #tpu.memory_space<vmem>> -> memref<136x128xf32, #tpu.memory_space<vmem>>
    %4 = tpu.memref_slice %arg5[%c0_i32_1] : memref<4x!tpu.dma_semaphore, #tpu.memory_space<semaphore_mem>> -> memref<1x!tpu.dma_semaphore, #tpu.memory_space<semaphore_mem>>
    %5 = tpu.memref_squeeze %4 : memref<1x!tpu.dma_semaphore, #tpu.memory_space<semaphore_mem>> -> memref<!tpu.dma_semaphore, #tpu.memory_space<semaphore_mem>>
    tpu.enqueue_dma source(%1 : memref<136x128xf32, #tpu.memory_space<any>>) target(%3 : memref<136x128xf32, #tpu.memory_space<vmem>>) target_semaphore(%5 : memref<!tpu.dma_semaphore, #tpu.memory_space<semaphore_mem>>)
    %c1_i32 = arith.constant 1 : i32
    %c1_i32_6 = arith.constant 1 : i32
    %c1_i32_7 = arith.constant 1 : i32
    %c0_i32_8 = arith.constant 0 : i32
    %c0_i32_9 = arith.constant 0 : i32
    %6 = tpu.memref_slice %arg1[%c1_i32, %c0_i32_8, %c0_i32_9] : memref<4x136x128xf32, #tpu.memory_space<any>> -> memref<1x136x128xf32, #tpu.memory_space<any>>
    %7 = tpu.memref_squeeze %6 : memref<1x136x128xf32, #tpu.memory_space<any>> -> memref<136x128xf32, #tpu.memory_space<any>>
    %c0_i32_10 = arith.constant 0 : i32
    %c0_i32_11 = arith.constant 0 : i32
    %8 = tpu.memref_slice %arg4[%c1_i32_6, %c0_i32_10, %c0_i32_11] : memref<4x136x128xf32, #tpu.memory_space<vmem>> -> memref<1x136x128xf32, #tpu.memory_space<vmem>>
    %9 = tpu.memref_squeeze %8 : memref<1x136x128xf32, #tpu.memory_space<vmem>> -> memref<136x128xf32, #tpu.memory_space<vmem>>
    %10 = tpu.memref_slice %arg5[%c1_i32_7] : memref<4x!tpu.dma_semaphore, #tpu.memory_space<semaphore_mem>> -> memref<1x!tpu.dma_semaphore, #tpu.memory_space<semaphore_mem>>
    %11 = tpu.memref_squeeze %10 : memref<1x!tpu.dma_semaphore, #tpu.memory_space<semaphore_mem>> -> memref<!tpu.dma_semaphore, #tpu.memory_space<semaphore_mem>>
    tpu.enqueue_dma source(%7 : memref<136x128xf32, #tpu.memory_space<any>>) target(%9 : memref<136x128xf32, #tpu.memory_space<vmem>>) target_semaphore(%11 : memref<!tpu.dma_semaphore, #tpu.memory_space<semaphore_mem>>)
    %c2_i32 = arith.constant 2 : i32
    %c2_i32_12 = arith.constant 2 : i32
    %c2_i32_13 = arith.constant 2 : i32
    %c0_i32_14 = arith.constant 0 : i32
    %c0_i32_15 = arith.constant 0 : i32
    %12 = tpu.memref_slice %arg1[%c2_i32, %c0_i32_14, %c0_i32_15] : memref<4x136x128xf32, #tpu.memory_space<any>> -> memref<1x136x128xf32, #tpu.memory_space<any>>
    %13 = tpu.memref_squeeze %12 : memref<1x136x128xf32, #tpu.memory_space<any>> -> memref<136x128xf32, #tpu.memory_space<any>>
    %c0_i32_16 = arith.constant 0 : i32
    %c0_i32_17 = arith.constant 0 : i32
    %14 = tpu.memref_slice %arg4[%c2_i32_12, %c0_i32_16, %c0_i32_17] : memref<4x136x128xf32, #tpu.memory_space<vmem>> -> memref<1x136x128xf32, #tpu.memory_space<vmem>>
    %15 = tpu.memref_squeeze %14 : memref<1x136x128xf32, #tpu.memory_space<vmem>> -> memref<136x128xf32, #tpu.memory_space<vmem>>
    %16 = tpu.memref_slice %arg5[%c2_i32_13] : memref<4x!tpu.dma_semaphore, #tpu.memory_space<semaphore_mem>> -> memref<1x!tpu.dma_semaphore, #tpu.memory_space<semaphore_mem>>
    %17 = tpu.memref_squeeze %16 : memref<1x!tpu.dma_semaphore, #tpu.memory_space<semaphore_mem>> -> memref<!tpu.dma_semaphore, #tpu.memory_space<semaphore_mem>>
    tpu.enqueue_dma source(%13 : memref<136x128xf32, #tpu.memory_space<any>>) target(%15 : memref<136x128xf32, #tpu.memory_space<vmem>>) target_semaphore(%17 : memref<!tpu.dma_semaphore, #tpu.memory_space<semaphore_mem>>)
    %c3_i32 = arith.constant 3 : i32
    %c3_i32_18 = arith.constant 3 : i32
    %c3_i32_19 = arith.constant 3 : i32
    %c0_i32_20 = arith.constant 0 : i32
    %c0_i32_21 = arith.constant 0 : i32
    %18 = tpu.memref_slice %arg1[%c3_i32, %c0_i32_20, %c0_i32_21] : memref<4x136x128xf32, #tpu.memory_space<any>> -> memref<1x136x128xf32, #tpu.memory_space<any>>
    %19 = tpu.memref_squeeze %18 : memref<1x136x128xf32, #tpu.memory_space<any>> -> memref<136x128xf32, #tpu.memory_space<any>>
    %c0_i32_22 = arith.constant 0 : i32
    %c0_i32_23 = arith.constant 0 : i32
    %20 = tpu.memref_slice %arg4[%c3_i32_18, %c0_i32_22, %c0_i32_23] : memref<4x136x128xf32, #tpu.memory_space<vmem>> -> memref<1x136x128xf32, #tpu.memory_space<vmem>>
    %21 = tpu.memref_squeeze %20 : memref<1x136x128xf32, #tpu.memory_space<vmem>> -> memref<136x128xf32, #tpu.memory_space<vmem>>
    %22 = tpu.memref_slice %arg5[%c3_i32_19] : memref<4x!tpu.dma_semaphore, #tpu.memory_space<semaphore_mem>> -> memref<1x!tpu.dma_semaphore, #tpu.memory_space<semaphore_mem>>
    %23 = tpu.memref_squeeze %22 : memref<1x!tpu.dma_semaphore, #tpu.memory_space<semaphore_mem>> -> memref<!tpu.dma_semaphore, #tpu.memory_space<semaphore_mem>>
    tpu.enqueue_dma source(%19 : memref<136x128xf32, #tpu.memory_space<any>>) target(%21 : memref<136x128xf32, #tpu.memory_space<vmem>>) target_semaphore(%23 : memref<!tpu.dma_semaphore, #tpu.memory_space<semaphore_mem>>)
    %cst = arith.constant 0.000000e+00 : f32
    %24 = vector.broadcast %cst : f32 to vector<8x128xf32>
    %c0 = arith.constant 0 : index
    %c0_24 = arith.constant 0 : index
    %25 = vector.load %arg3[%c0, %c0_24] : memref<8x128xf32, #tpu.memory_space<vmem>>, vector<8x128xf32>
    tpu.vector_store %arg3[%c0, %c0_24], %24 {strides = array<i32>} : memref<8x128xf32, #tpu.memory_space<vmem>>, vector<8x128xf32>,
    %c0_25 = arith.constant 0 : index
    %c0_26 = arith.constant 0 : index
    %26 = vector.load %arg0[%c0_25, %c0_26] : memref<8x32xf32, #tpu.memory_space<vmem>>, vector<8x32xf32>
    %c0_27 = arith.constant 0 : index
    %c0_28 = arith.constant 0 : index
    %27 = vector.load %arg3[%c0_27, %c0_28] : memref<8x128xf32, #tpu.memory_space<vmem>>, vector<8x32xf32>
    tpu.vector_store %arg3[%c0_27, %c0_28], %26 {strides = array<i32>} : memref<8x128xf32, #tpu.memory_space<vmem>>, vector<8x32xf32>,
    %c0_29 = arith.constant 0 : index
    %c0_30 = arith.constant 0 : index
    %28 = vector.load %arg3[%c0_29, %c0_30] : memref<8x128xf32, #tpu.memory_space<vmem>>, vector<8x128xf32>
    %c0_i32_31 = arith.constant 0 : i32
    %c0_i32_32 = arith.constant 0 : i32
    %c0_i32_33 = arith.constant 0 : i32
    %c0_i32_34 = arith.constant 0 : i32
    %c0_i32_35 = arith.constant 0 : i32
    %29 = tpu.memref_slice %arg1[%c0_i32_31, %c0_i32_34, %c0_i32_35] : memref<4x136x128xf32, #tpu.memory_space<any>> -> memref<1x136x128xf32, #tpu.memory_space<any>>
    %30 = tpu.memref_squeeze %29 : memref<1x136x128xf32, #tpu.memory_space<any>> -> memref<136x128xf32, #tpu.memory_space<any>>
    %c0_i32_36 = arith.constant 0 : i32
    %c0_i32_37 = arith.constant 0 : i32
    %31 = tpu.memref_slice %arg4[%c0_i32_32, %c0_i32_36, %c0_i32_37] : memref<4x136x128xf32, #tpu.memory_space<vmem>> -> memref<1x136x128xf32, #tpu.memory_space<vmem>>
    %32 = tpu.memref_squeeze %31 : memref<1x136x128xf32, #tpu.memory_space<vmem>> -> memref<136x128xf32, #tpu.memory_space<vmem>>
    %33 = tpu.memref_slice %arg5[%c0_i32_33] : memref<4x!tpu.dma_semaphore, #tpu.memory_space<semaphore_mem>> -> memref<1x!tpu.dma_semaphore, #tpu.memory_space<semaphore_mem>>
    %34 = tpu.memref_squeeze %33 : memref<1x!tpu.dma_semaphore, #tpu.memory_space<semaphore_mem>> -> memref<!tpu.dma_semaphore, #tpu.memory_space<semaphore_mem>>
    tpu.wait_dma2 semaphore(%34 : memref<!tpu.dma_semaphore, #tpu.memory_space<semaphore_mem>>) src(%30 : memref<136x128xf32, #tpu.memory_space<any>>) dst(%32 : memref<136x128xf32, #tpu.memory_space<vmem>>)
    %c0_38 = arith.constant 0 : index
    %c0_39 = arith.constant 0 : index
    %c0_40 = arith.constant 0 : index
    %35 = vector.load %arg4[%c0_38, %c0_39, %c0_40] : memref<4x136x128xf32, #tpu.memory_space<vmem>>, vector<1x128x128xf32>
    %36 = vector.shape_cast %35 : vector<1x128x128xf32> to vector<128x128xf32>
    %c0_41 = arith.constant 0 : index
    %c128 = arith.constant 128 : index
    %c0_42 = arith.constant 0 : index
    %37 = vector.load %arg4[%c0_41, %c128, %c0_42] : memref<4x136x128xf32, #tpu.memory_space<vmem>>, vector<1x8x128xf32>
    %38 = vector.shape_cast %37 : vector<1x8x128xf32> to vector<8x128xf32>
    %39 = vector.extract_strided_slice %38 {offsets = [0, 0], sizes = [1, 128], strides = [1, 1]} : vector<8x128xf32> to vector<1x128xf32>
    %40 = vector.extract_strided_slice %38 {offsets = [1, 0], sizes = [1, 128], strides = [1, 1]} : vector<8x128xf32> to vector<1x128xf32>
    %cst_43 = arith.constant dense<0.000000e+00> : vector<8x128xf32>
    %41 = tpu.matmul %28, %36, %cst_43 {dimension_numbers = #tpu.dot_dimension_numbers<[1], [0], [0], [1], [0, 0, 1, 1], [], []>} : vector<8x128xf32>, vector<128x128xf32>, vector<8x128xf32> -> vector<8x128xf32>
    %cst_44 = arith.constant dense<0.000000e+00> : vector<128xf32>
    %42 = vector.multi_reduction <add>, %41, %cst_44 [0] : vector<8x128xf32> to vector<128xf32>
    %43 = vector.shape_cast %42 : vector<128xf32> to vector<1x128xf32>
    %cst_45 = arith.constant 1.250000e-01 : f32
    %44 = vector.broadcast %cst_45 : f32 to vector<1x128xf32>
    %45 = arith.mulf %43, %44 : vector<1x128xf32>
    %46 = vector.broadcast %45 : vector<1x128xf32> to vector<8x128xf32>
    %47 = arith.subf %41, %46 : vector<8x128xf32>
    %48 = arith.mulf %47, %47 : vector<8x128xf32>
    %cst_46 = arith.constant dense<0.000000e+00> : vector<128xf32>
    %49 = vector.multi_reduction <add>, %48, %cst_46 [0] : vector<8x128xf32> to vector<128xf32>
    %50 = vector.shape_cast %49 : vector<128xf32> to vector<1x128xf32>
    %cst_47 = arith.constant 1.250000e-01 : f32
    %51 = vector.broadcast %cst_47 : f32 to vector<1x128xf32>
    %52 = arith.mulf %50, %51 : vector<1x128xf32>
    %cst_48 = arith.constant 9.99999974E-6 : f32
    %53 = vector.broadcast %cst_48 : f32 to vector<1x128xf32>
    %54 = arith.addf %52, %53 : vector<1x128xf32>
    %55 = math.rsqrt %54 : vector<1x128xf32>
    %56 = arith.mulf %39, %55 : vector<1x128xf32>
    %57 = vector.broadcast %56 : vector<1x128xf32> to vector<8x128xf32>
    %58 = arith.mulf %47, %57 : vector<8x128xf32>
    %59 = vector.broadcast %40 : vector<1x128xf32> to vector<8x128xf32>
    %60 = arith.addf %58, %59 : vector<8x128xf32>
    %cst_49 = arith.constant 0.000000e+00 : f32
    %61 = vector.broadcast %cst_49 : f32 to vector<8x128xf32>
    %62 = arith.maximumf %60, %61 : vector<8x128xf32>
    %63 = arith.addf %28, %62 : vector<8x128xf32>
    %c1_i32_50 = arith.constant 1 : i32
    %c1_i32_51 = arith.constant 1 : i32
    %c1_i32_52 = arith.constant 1 : i32
    %c0_i32_53 = arith.constant 0 : i32
    %c0_i32_54 = arith.constant 0 : i32
    %64 = tpu.memref_slice %arg1[%c1_i32_50, %c0_i32_53, %c0_i32_54] : memref<4x136x128xf32, #tpu.memory_space<any>> -> memref<1x136x128xf32, #tpu.memory_space<any>>
    %65 = tpu.memref_squeeze %64 : memref<1x136x128xf32, #tpu.memory_space<any>> -> memref<136x128xf32, #tpu.memory_space<any>>
    %c0_i32_55 = arith.constant 0 : i32
    %c0_i32_56 = arith.constant 0 : i32
    %66 = tpu.memref_slice %arg4[%c1_i32_51, %c0_i32_55, %c0_i32_56] : memref<4x136x128xf32, #tpu.memory_space<vmem>> -> memref<1x136x128xf32, #tpu.memory_space<vmem>>
    %67 = tpu.memref_squeeze %66 : memref<1x136x128xf32, #tpu.memory_space<vmem>> -> memref<136x128xf32, #tpu.memory_space<vmem>>
    %68 = tpu.memref_slice %arg5[%c1_i32_52] : memref<4x!tpu.dma_semaphore, #tpu.memory_space<semaphore_mem>> -> memref<1x!tpu.dma_semaphore, #tpu.memory_space<semaphore_mem>>
    %69 = tpu.memref_squeeze %68 : memref<1x!tpu.dma_semaphore, #tpu.memory_space<semaphore_mem>> -> memref<!tpu.dma_semaphore, #tpu.memory_space<semaphore_mem>>
    tpu.wait_dma2 semaphore(%69 : memref<!tpu.dma_semaphore, #tpu.memory_space<semaphore_mem>>) src(%65 : memref<136x128xf32, #tpu.memory_space<any>>) dst(%67 : memref<136x128xf32, #tpu.memory_space<vmem>>)
    %c1 = arith.constant 1 : index
    %c0_57 = arith.constant 0 : index
    %c0_58 = arith.constant 0 : index
    %70 = vector.load %arg4[%c1, %c0_57, %c0_58] : memref<4x136x128xf32, #tpu.memory_space<vmem>>, vector<1x128x128xf32>
    %71 = vector.shape_cast %70 : vector<1x128x128xf32> to vector<128x128xf32>
    %c1_59 = arith.constant 1 : index
    %c128_60 = arith.constant 128 : index
    %c0_61 = arith.constant 0 : index
    %72 = vector.load %arg4[%c1_59, %c128_60, %c0_61] : memref<4x136x128xf32, #tpu.memory_space<vmem>>, vector<1x8x128xf32>
    %73 = vector.shape_cast %72 : vector<1x8x128xf32> to vector<8x128xf32>
    %74 = vector.extract_strided_slice %73 {offsets = [0, 0], sizes = [1, 128], strides = [1, 1]} : vector<8x128xf32> to vector<1x128xf32>
    %75 = vector.extract_strided_slice %73 {offsets = [1, 0], sizes = [1, 128], strides = [1, 1]} : vector<8x128xf32> to vector<1x128xf32>
    %cst_62 = arith.constant dense<0.000000e+00> : vector<8x128xf32>
    %76 = tpu.matmul %63, %71, %cst_62 {dimension_numbers = #tpu.dot_dimension_numbers<[1], [0], [0], [1], [0, 0, 1, 1], [], []>} : vector<8x128xf32>, vector<128x128xf32>, vector<8x128xf32> -> vector<8x128xf32>
    %cst_63 = arith.constant dense<0.000000e+00> : vector<128xf32>
    %77 = vector.multi_reduction <add>, %76, %cst_63 [0] : vector<8x128xf32> to vector<128xf32>
    %78 = vector.shape_cast %77 : vector<128xf32> to vector<1x128xf32>
    %cst_64 = arith.constant 1.250000e-01 : f32
    %79 = vector.broadcast %cst_64 : f32 to vector<1x128xf32>
    %80 = arith.mulf %78, %79 : vector<1x128xf32>
    %81 = vector.broadcast %80 : vector<1x128xf32> to vector<8x128xf32>
    %82 = arith.subf %76, %81 : vector<8x128xf32>
    %83 = arith.mulf %82, %82 : vector<8x128xf32>
    %cst_65 = arith.constant dense<0.000000e+00> : vector<128xf32>
    %84 = vector.multi_reduction <add>, %83, %cst_65 [0] : vector<8x128xf32> to vector<128xf32>
    %85 = vector.shape_cast %84 : vector<128xf32> to vector<1x128xf32>
    %cst_66 = arith.constant 1.250000e-01 : f32
    %86 = vector.broadcast %cst_66 : f32 to vector<1x128xf32>
    %87 = arith.mulf %85, %86 : vector<1x128xf32>
    %cst_67 = arith.constant 9.99999974E-6 : f32
    %88 = vector.broadcast %cst_67 : f32 to vector<1x128xf32>
    %89 = arith.addf %87, %88 : vector<1x128xf32>
    %90 = math.rsqrt %89 : vector<1x128xf32>
    %91 = arith.mulf %74, %90 : vector<1x128xf32>
    %92 = vector.broadcast %91 : vector<1x128xf32> to vector<8x128xf32>
    %93 = arith.mulf %82, %92 : vector<8x128xf32>
    %94 = vector.broadcast %75 : vector<1x128xf32> to vector<8x128xf32>
    %95 = arith.addf %93, %94 : vector<8x128xf32>
    %cst_68 = arith.constant 0.000000e+00 : f32
    %96 = vector.broadcast %cst_68 : f32 to vector<8x128xf32>
    %97 = arith.maximumf %95, %96 : vector<8x128xf32>
    %98 = arith.addf %63, %97 : vector<8x128xf32>
    %c2_i32_69 = arith.constant 2 : i32
    %c2_i32_70 = arith.constant 2 : i32
    %c2_i32_71 = arith.constant 2 : i32
    %c0_i32_72 = arith.constant 0 : i32
    %c0_i32_73 = arith.constant 0 : i32
    %99 = tpu.memref_slice %arg1[%c2_i32_69, %c0_i32_72, %c0_i32_73] : memref<4x136x128xf32, #tpu.memory_space<any>> -> memref<1x136x128xf32, #tpu.memory_space<any>>
    %100 = tpu.memref_squeeze %99 : memref<1x136x128xf32, #tpu.memory_space<any>> -> memref<136x128xf32, #tpu.memory_space<any>>
    %c0_i32_74 = arith.constant 0 : i32
    %c0_i32_75 = arith.constant 0 : i32
    %101 = tpu.memref_slice %arg4[%c2_i32_70, %c0_i32_74, %c0_i32_75] : memref<4x136x128xf32, #tpu.memory_space<vmem>> -> memref<1x136x128xf32, #tpu.memory_space<vmem>>
    %102 = tpu.memref_squeeze %101 : memref<1x136x128xf32, #tpu.memory_space<vmem>> -> memref<136x128xf32, #tpu.memory_space<vmem>>
    %103 = tpu.memref_slice %arg5[%c2_i32_71] : memref<4x!tpu.dma_semaphore, #tpu.memory_space<semaphore_mem>> -> memref<1x!tpu.dma_semaphore, #tpu.memory_space<semaphore_mem>>
    %104 = tpu.memref_squeeze %103 : memref<1x!tpu.dma_semaphore, #tpu.memory_space<semaphore_mem>> -> memref<!tpu.dma_semaphore, #tpu.memory_space<semaphore_mem>>
    tpu.wait_dma2 semaphore(%104 : memref<!tpu.dma_semaphore, #tpu.memory_space<semaphore_mem>>) src(%100 : memref<136x128xf32, #tpu.memory_space<any>>) dst(%102 : memref<136x128xf32, #tpu.memory_space<vmem>>)
    %c2 = arith.constant 2 : index
    %c0_76 = arith.constant 0 : index
    %c0_77 = arith.constant 0 : index
    %105 = vector.load %arg4[%c2, %c0_76, %c0_77] : memref<4x136x128xf32, #tpu.memory_space<vmem>>, vector<1x128x128xf32>
    %106 = vector.shape_cast %105 : vector<1x128x128xf32> to vector<128x128xf32>
    %c2_78 = arith.constant 2 : index
    %c128_79 = arith.constant 128 : index
    %c0_80 = arith.constant 0 : index
    %107 = vector.load %arg4[%c2_78, %c128_79, %c0_80] : memref<4x136x128xf32, #tpu.memory_space<vmem>>, vector<1x8x128xf32>
    %108 = vector.shape_cast %107 : vector<1x8x128xf32> to vector<8x128xf32>
    %109 = vector.extract_strided_slice %108 {offsets = [0, 0], sizes = [1, 128], strides = [1, 1]} : vector<8x128xf32> to vector<1x128xf32>
    %110 = vector.extract_strided_slice %108 {offsets = [1, 0], sizes = [1, 128], strides = [1, 1]} : vector<8x128xf32> to vector<1x128xf32>
    %cst_81 = arith.constant dense<0.000000e+00> : vector<8x128xf32>
    %111 = tpu.matmul %98, %106, %cst_81 {dimension_numbers = #tpu.dot_dimension_numbers<[1], [0], [0], [1], [0, 0, 1, 1], [], []>} : vector<8x128xf32>, vector<128x128xf32>, vector<8x128xf32> -> vector<8x128xf32>
    %cst_82 = arith.constant dense<0.000000e+00> : vector<128xf32>
    %112 = vector.multi_reduction <add>, %111, %cst_82 [0] : vector<8x128xf32> to vector<128xf32>
    %113 = vector.shape_cast %112 : vector<128xf32> to vector<1x128xf32>
    %cst_83 = arith.constant 1.250000e-01 : f32
    %114 = vector.broadcast %cst_83 : f32 to vector<1x128xf32>
    %115 = arith.mulf %113, %114 : vector<1x128xf32>
    %116 = vector.broadcast %115 : vector<1x128xf32> to vector<8x128xf32>
    %117 = arith.subf %111, %116 : vector<8x128xf32>
    %118 = arith.mulf %117, %117 : vector<8x128xf32>
    %cst_84 = arith.constant dense<0.000000e+00> : vector<128xf32>
    %119 = vector.multi_reduction <add>, %118, %cst_84 [0] : vector<8x128xf32> to vector<128xf32>
    %120 = vector.shape_cast %119 : vector<128xf32> to vector<1x128xf32>
    %cst_85 = arith.constant 1.250000e-01 : f32
    %121 = vector.broadcast %cst_85 : f32 to vector<1x128xf32>
    %122 = arith.mulf %120, %121 : vector<1x128xf32>
    %cst_86 = arith.constant 9.99999974E-6 : f32
    %123 = vector.broadcast %cst_86 : f32 to vector<1x128xf32>
    %124 = arith.addf %122, %123 : vector<1x128xf32>
    %125 = math.rsqrt %124 : vector<1x128xf32>
    %126 = arith.mulf %109, %125 : vector<1x128xf32>
    %127 = vector.broadcast %126 : vector<1x128xf32> to vector<8x128xf32>
    %128 = arith.mulf %117, %127 : vector<8x128xf32>
    %129 = vector.broadcast %110 : vector<1x128xf32> to vector<8x128xf32>
    %130 = arith.addf %128, %129 : vector<8x128xf32>
    %cst_87 = arith.constant 2.000000e-01 : f32
    %131 = vector.broadcast %cst_87 : f32 to vector<8x128xf32>
    %132 = arith.mulf %131, %130 : vector<8x128xf32>
    %133 = arith.maximumf %130, %132 : vector<8x128xf32>
    %c3_i32_88 = arith.constant 3 : i32
    %c3_i32_89 = arith.constant 3 : i32
    %c3_i32_90 = arith.constant 3 : i32
    %c0_i32_91 = arith.constant 0 : i32
    %c0_i32_92 = arith.constant 0 : i32
    %134 = tpu.memref_slice %arg1[%c3_i32_88, %c0_i32_91, %c0_i32_92] : memref<4x136x128xf32, #tpu.memory_space<any>> -> memref<1x136x128xf32, #tpu.memory_space<any>>
    %135 = tpu.memref_squeeze %134 : memref<1x136x128xf32, #tpu.memory_space<any>> -> memref<136x128xf32, #tpu.memory_space<any>>
    %c0_i32_93 = arith.constant 0 : i32
    %c0_i32_94 = arith.constant 0 : i32
    %136 = tpu.memref_slice %arg4[%c3_i32_89, %c0_i32_93, %c0_i32_94] : memref<4x136x128xf32, #tpu.memory_space<vmem>> -> memref<1x136x128xf32, #tpu.memory_space<vmem>>
    %137 = tpu.memref_squeeze %136 : memref<1x136x128xf32, #tpu.memory_space<vmem>> -> memref<136x128xf32, #tpu.memory_space<vmem>>
    %138 = tpu.memref_slice %arg5[%c3_i32_90] : memref<4x!tpu.dma_semaphore, #tpu.memory_space<semaphore_mem>> -> memref<1x!tpu.dma_semaphore, #tpu.memory_space<semaphore_mem>>
    %139 = tpu.memref_squeeze %138 : memref<1x!tpu.dma_semaphore, #tpu.memory_space<semaphore_mem>> -> memref<!tpu.dma_semaphore, #tpu.memory_space<semaphore_mem>>
    tpu.wait_dma2 semaphore(%139 : memref<!tpu.dma_semaphore, #tpu.memory_space<semaphore_mem>>) src(%135 : memref<136x128xf32, #tpu.memory_space<any>>) dst(%137 : memref<136x128xf32, #tpu.memory_space<vmem>>)
    %c3 = arith.constant 3 : index
    %c0_95 = arith.constant 0 : index
    %c0_96 = arith.constant 0 : index
    %140 = vector.load %arg4[%c3, %c0_95, %c0_96] : memref<4x136x128xf32, #tpu.memory_space<vmem>>, vector<1x128x128xf32>
    %141 = vector.shape_cast %140 : vector<1x128x128xf32> to vector<128x128xf32>
    %c3_97 = arith.constant 3 : index
    %c128_98 = arith.constant 128 : index
    %c0_99 = arith.constant 0 : index
    %142 = vector.load %arg4[%c3_97, %c128_98, %c0_99] : memref<4x136x128xf32, #tpu.memory_space<vmem>>, vector<1x8x128xf32>
    %143 = vector.shape_cast %142 : vector<1x8x128xf32> to vector<8x128xf32>
    %144 = vector.extract_strided_slice %143 {offsets = [0, 0], sizes = [1, 128], strides = [1, 1]} : vector<8x128xf32> to vector<1x128xf32>
    %cst_100 = arith.constant dense<0.000000e+00> : vector<8x128xf32>
    %145 = tpu.matmul %133, %141, %cst_100 {dimension_numbers = #tpu.dot_dimension_numbers<[1], [0], [0], [1], [0, 0, 1, 1], [], []>} : vector<8x128xf32>, vector<128x128xf32>, vector<8x128xf32> -> vector<8x128xf32>
    %146 = vector.broadcast %144 : vector<1x128xf32> to vector<8x128xf32>
    %147 = arith.addf %145, %146 : vector<8x128xf32>
    %c0_101 = arith.constant 0 : index
    %c0_102 = arith.constant 0 : index
    %148 = vector.load %arg2[%c0_101, %c0_102] : memref<8x256xf32, #tpu.memory_space<vmem>>, vector<8x128xf32>
    tpu.vector_store %arg2[%c0_101, %c0_102], %147 {strides = array<i32>} : memref<8x256xf32, #tpu.memory_space<vmem>>, vector<8x128xf32>,
    %c0_103 = arith.constant 0 : index
    %c128_104 = arith.constant 128 : index
    %149 = vector.load %arg2[%c0_103, %c128_104] : memref<8x256xf32, #tpu.memory_space<vmem>>, vector<8x128xf32>
    tpu.vector_store %arg2[%c0_103, %c128_104], %133 {strides = array<i32>} : memref<8x256xf32, #tpu.memory_space<vmem>>, vector<8x128xf32>,
    return
  }
}

</mosaic_0001>

<llo_original>
// kernel: tpu_custom_call.1
$region0: #{tpu_custom_call.1}
  #allocation0 [shape = 'u32[]', space=smem, size = 0x4, offset = 0x4, fixed_abs, tag = 'smem constant byte address 0x4 - core index']
  #allocation1 [shape = 'u32[72,128]{1,0:T(1,128)}', space=vmem, size = 0x9000, scoped, tag = 'internal scratch']
  #allocation2 [shape = 'f32[8,128]{1,0:T(8,128)}', space=vmem, size = 0x1000, scoped, tag = 'scratch operand']
  #allocation3 [shape = 'f32[4,136,128]{2,1,0:T(8,128)}', space=vmem, size = 0x44000, scoped, tag = 'scratch operand']
  #allocation4 [shape = 's32[4]{0}', space=sflag, size = 0x10, scoped, tag = 'scratch operand']
  #allocation9 [shape = 's32[]', space=sflag, size = 0x4, offset = 0, fixed_abs, tag = 'sflag constant byte address 0x0 - dummy sync flag']
  #allocation10 [shape = 's32[]', space=sflag, size = 0x4, offset = 0, fixed_abs, tag = 'sflag constant byte address 0x0 - dummy sync flag']
  #allocation11 [shape = 'u32[]', space=smem, size = 0x4, offset = 0x44, fixed_abs, tag = 'smem constant byte address 0x44 - assertion arg 0']
  #allocation12 [shape = 'u32[]', space=smem, size = 0x4, offset = 0x48, fixed_abs, tag = 'smem constant byte address 0x48 - assertion arg 1']
  #allocation13 [shape = 's32[]', space=sflag, size = 0x4, offset = 0, fixed_abs, tag = 'sflag constant byte address 0x0 - dummy sync flag']
  #allocation14 [shape = 's32[]', space=sflag, size = 0x4, offset = 0, fixed_abs, tag = 'sflag constant byte address 0x0 - dummy sync flag']
  #allocation15 [shape = 's32[]', space=sflag, size = 0x4, offset = 0, fixed_abs, tag = 'sflag constant byte address 0x0 - dummy sync flag']
  #allocation16 [shape = 's32[]', space=sflag, size = 0x4, offset = 0, fixed_abs, tag = 'sflag constant byte address 0x0 - dummy sync flag']
  #allocation17 [shape = 's32[]', space=sflag, size = 0x4, offset = 0, fixed_abs, tag = 'sflag constant byte address 0x0 - dummy sync flag']
  #allocation18 [shape = 's32[]', space=sflag, size = 0x4, offset = 0, fixed_abs, tag = 'sflag constant byte address 0x0 - dummy sync flag']
  %s0 = inlined_call_operand.hbm [shape: f32[8,32], index: 0, kind: input, shape index: {}]
  %s1 = inlined_call_operand.hbm [shape: f32[4,136,128], index: 1, kind: input, shape index: {}]
  %s2 = inlined_call_operand.hbm [shape: f32[8,256], index: 2, kind: output, shape index: {}]
  %s3 = sld [smem:[#allocation0]]
  $region34: #{tpu_custom_call.1} parent=0
    _
  %s5 = ssub.s32 1, %s3
  %s6 = scalar_select 0, %s5, %s3
  $region1: #{tpu_custom_call.1} parent=0
    #allocation5 [shape = 'u8[4096]{0}', space=vmem, size = 0x1000, scoped, tag = 'input window, operand 0, single buffered']
    #allocation6 [shape = 's32[1]{0}', space=sflag, size = 0x4, scoped, tag = 'scoped memory for tpu_custom_call.1']
    #allocation7 [shape = 's32[1]{0}', space=sflag, size = 0x4, scoped, tag = 'scoped memory for tpu_custom_call.1']
    #allocation8 [shape = 'u8[8192]{0}', space=vmem, size = 0x2000, scoped, tag = 'output window, operand 0, single buffered']
    %7 = vsyncpa [#allocation6], 0
    %8 = vsyncpa [#allocation7], 0
    // Predicated region
    $region2: #{tpu_custom_call.1} parent=1 // pred_check
      _
    $region3: #{tpu_custom_call.1} parent=1 // pred_check_branch
      %10 = sbr.rel (0) target = $region5
    $region4: #{tpu_custom_call.1} parent=1 // pred_region
      %12 = vsyncadd [#allocation6], 0
      %s14 = sshll.u32 %s0, 4
      %s15 = int_to_ptr.hbm [resolvable:$true] %s14
      %s16 = sshll.u32 [#allocation5], 4
      %s17 = int_to_ptr.vmem [resolvable:$true] %s16
      %19 = dma.hbm_to_vmem [thread:$0]  %s15, 128, %s17, [#allocation6]
    $region5: #{tpu_custom_call.1} parent=1 // pred_fallthru
      _
    // Predicated region
    $region6: #{tpu_custom_call.1} parent=1 // pred_check
      _
    $region7: #{tpu_custom_call.1} parent=1 // pred_check_branch
      %21 = sbr.rel (0) target = $region9
    $region8: #{tpu_custom_call.1} parent=1 // pred_region
      %23 = dma.done [#allocation6], 128
    $region9: #{tpu_custom_call.1} parent=1 // pred_fallthru
      _
    // Predicated region
    $region10: #{tpu_custom_call.1} parent=1 // pred_check
      _
    $region11: #{tpu_custom_call.1} parent=1 // pred_check_branch
      %25 = sbr.rel target = $region13
    $region12: #{tpu_custom_call.1} parent=1 // pred_region
      %26 = sst [smem:[#allocation11]] [#allocation10]
      %27 = sst [smem:[#allocation12]] [#allocation9]
    $region13: #{tpu_custom_call.1} parent=1 // pred_fallthru
      _
    %29 = shalt.err (0)
    %s31 = sshll.u32 %s1, 4
    %s32 = int_to_ptr.hbm [resolvable:$true] %s31
    %s33 = sshll.u32 [#allocation3], 4
    %s34 = int_to_ptr.vmem [resolvable:$true] %s33
    %36 = dma.hbm_to_vmem [thread:$0]  %s32, 2176, %s34, [#allocation4]
    %s37 = scalar_lea.hbm %s1, 136
    %s38 = scalar_lea.vmem [#allocation3], 136
    %s39 = scalar_lea.sflag [#allocation4], 1
    // Predicated region
    $region14: #{tpu_custom_call.1} parent=1 // pred_check
      _
    $region15: #{tpu_custom_call.1} parent=1 // pred_check_branch
      %41 = sbr.rel target = $region17
    $region16: #{tpu_custom_call.1} parent=1 // pred_region
      %42 = sst [smem:[#allocation11]] [#allocation14]
      %43 = sst [smem:[#allocation12]] [#allocation13]
    $region17: #{tpu_custom_call.1} parent=1 // pred_fallthru
      _
    %45 = shalt.err (0)
    %s47 = sshll.u32 %s37, 4
    %s48 = int_to_ptr.hbm [resolvable:$true] %s47
    %s49 = sshll.u32 %s38, 4
    %s50 = int_to_ptr.vmem [resolvable:$true] %s49
    %52 = dma.hbm_to_vmem [thread:$0]  %s48, 2176, %s50, %s39
    %s53 = scalar_lea.hbm %s1, 272
    %s54 = scalar_lea.vmem [#allocation3], 272
    %s55 = scalar_lea.sflag [#allocation4], 2
    // Predicated region
    $region18: #{tpu_custom_call.1} parent=1 // pred_check
      _
    $region19: #{tpu_custom_call.1} parent=1 // pred_check_branch
      %57 = sbr.rel target = $region21
    $region20: #{tpu_custom_call.1} parent=1 // pred_region
      %58 = sst [smem:[#allocation11]] [#allocation16]
      %59 = sst [smem:[#allocation12]] [#allocation15]
    $region21: #{tpu_custom_call.1} parent=1 // pred_fallthru
      _
    %61 = shalt.err (0)
    %s63 = sshll.u32 %s53, 4
    %s64 = int_to_ptr.hbm [resolvable:$true] %s63
    %s65 = sshll.u32 %s54, 4
    %s66 = int_to_ptr.vmem [resolvable:$true] %s65
    %68 = dma.hbm_to_vmem [thread:$0]  %s64, 2176, %s66, %s55
    %s69 = scalar_lea.hbm %s1, 408
    %s70 = scalar_lea.vmem [#allocation3], 408
    %s71 = scalar_lea.sflag [#allocation4], 3
    // Predicated region
    $region22: #{tpu_custom_call.1} parent=1 // pred_check
      _
    $region23: #{tpu_custom_call.1} parent=1 // pred_check_branch
      %73 = sbr.rel target = $region25
    $region24: #{tpu_custom_call.1} parent=1 // pred_region
      %74 = sst [smem:[#allocation11]] [#allocation18]
      %75 = sst [smem:[#allocation12]] [#allocation17]
    $region25: #{tpu_custom_call.1} parent=1 // pred_fallthru
      _
    %77 = shalt.err (0)
    %s79 = sshll.u32 %s69, 4
    %s80 = int_to_ptr.hbm [resolvable:$true] %s79
    %s81 = sshll.u32 %s70, 4
    %s82 = int_to_ptr.vmem [resolvable:$true] %s81
    %84 = dma.hbm_to_vmem [thread:$0]  %s80, 2176, %s82, %s71
    %85 = vst [vmem:[#allocation2] sm:$0xff] 0.0
    %v86 = vld [vmem:[#allocation5] sm:$0xff]
    %vm87 = vcmask 261120
    %88 = vst.msk [vmem:[#allocation2] sm:$0xff] %vm87, %v86
    %v89 = vld [vmem:[#allocation2] sm:$0xff]
    %s90 = smul.u32 136, 1
    %s91 = sshll.u32 %s90, 4
    %92 = dma.done [#allocation4], %s91
    %v93 = vld [vmem:[#allocation3] sm:$0xff]
    %v94 = vld [vmem:[#allocation3 + $0x8] sm:$0xff]
    %v95 = vld [vmem:[#allocation3 + $0x10] sm:$0xff]
    %v96 = vld [vmem:[#allocation3 + $0x18] sm:$0xff]
    %v97 = vld [vmem:[#allocation3 + $0x20] sm:$0xff]
    %v98 = vld [vmem:[#allocation3 + $0x28] sm:$0xff]
    %v99 = vld [vmem:[#allocation3 + $0x30] sm:$0xff]
    %v100 = vld [vmem:[#allocation3 + $0x38] sm:$0xff]
    %v101 = vld [vmem:[#allocation3 + $0x40] sm:$0xff]
    %v102 = vld [vmem:[#allocation3 + $0x48] sm:$0xff]
    %v103 = vld [vmem:[#allocation3 + $0x50] sm:$0xff]
    %v104 = vld [vmem:[#allocation3 + $0x58] sm:$0xff]
    %v105 = vld [vmem:[#allocation3 + $0x60] sm:$0xff]
    %v106 = vld [vmem:[#allocation3 + $0x68] sm:$0xff]
    %v107 = vld [vmem:[#allocation3 + $0x70] sm:$0xff]
    %v108 = vld [vmem:[#allocation3 + $0x78] sm:$0xff]
    %v109 = vld [vmem:[#allocation3 + $0x80] sm:$0xff]
    %110 = vmatpush.msra.mxu0 %v108
    %111 = vmatpush.msra.mxu0 %v107
    %112 = vmatpush.msra.mxu0 %v106
    %113 = vmatpush.msra.mxu0 %v105
    %114 = vmatpush.msra.mxu0 %v104
    %115 = vmatpush.msra.mxu0 %v103
    %116 = vmatpush.msra.mxu0 %v102
    %117 = vmatpush.msra.mxu0 %v101
    %118 = vmatpush.msra.mxu0 %v100
    %119 = vmatpush.msra.mxu0 %v99
    %120 = vmatpush.msra.mxu0 %v98
    %121 = vmatpush.msra.mxu0 %v97
    %122 = vmatpush.msra.mxu0 %v96
    %123 = vmatpush.msra.mxu0 %v95
    %124 = vmatpush.msra.mxu0 %v94
    %125 = vmatpush.msra.mxu0 %v93
    %126 = vmatmul.f32.gmra.mxu0 %v89
    %v127 = vpop.f32.mrf.mxu0
    %v128 = vadd.f32 0.0, %v127
    %129 = vdwg.mxu0
    %v130 = vrot.slane %v128, 4
    %v131 = vadd.f32 %v128, %v130
    %v132 = vrot.slane %v131, 2
    %v133 = vadd.f32 %v131, %v132
    %v134 = vrot.slane %v133, 1
    %v135 = vadd.f32 %v133, %v134
    %v136 = vmul.f32 %v135, 0.125
    %v137 = vsub.f32 %v128, %v136
    %v138 = vmul.f32 %v137, %v137
    %v139 = vrot.slane %v138, 4
    %v140 = vadd.f32 %v138, %v139
    %v141 = vrot.slane %v140, 2
    %v142 = vadd.f32 %v140, %v141
    %v143 = vrot.slane %v142, 1
    %v144 = vadd.f32 %v142, %v143
    %v145 = vmul.f32 %v144, 0.125
    %v146 = vadd.f32 %v145, 1e-05
    %v147 = vrsqrt.pop %v146
    %v148 = vmul.f32 %v147, %v146
    %v149 = vmul.f32 %v148, %v147
    %v150 = vmul.f32 0.5, %v149
    %v151 = vsub.f32 1.5, %v150
    %v152 = vmul.f32 %v147, %v151
    %vm153 = vweird.f32 %v146
    %vm154 = vweird.f32 %v147
    %vm155 = vmor %vm153, %vm154
    %v156 = vsel %vm155, %v147, %v152
    %v157 = vmul.f32 %v109, %v156
    %v158 = vperm.slane %v157, 0
    %v159 = vmul.f32 %v137, %v158
    %v160 = vperm.slane %v109, 1
    %v161 = vadd.f32 %v159, %v160
    %v162 = vmax.f32 %v161, 0.0
    %v163 = vadd.f32 %v89, %v162
    %s164 = sshll.u32 %s90, 4
    %165 = dma.done %s39, %s164
    %v166 = vld [vmem:[%s38] sm:$0xff]
    %v167 = vld [vmem:[%s38 + $0x8] sm:$0xff]
    %v168 = vld [vmem:[%s38 + $0x10] sm:$0xff]
    %v169 = vld [vmem:[%s38 + $0x18] sm:$0xff]
    %v170 = vld [vmem:[%s38 + $0x20] sm:$0xff]
    %v171 = vld [vmem:[%s38 + $0x28] sm:$0xff]
    %v172 = vld [vmem:[%s38 + $0x30] sm:$0xff]
    %v173 = vld [vmem:[%s38 + $0x38] sm:$0xff]
    %v174 = vld [vmem:[%s38 + $0x40] sm:$0xff]
    %v175 = vld [vmem:[%s38 + $0x48] sm:$0xff]
    %v176 = vld [vmem:[%s38 + $0x50] sm:$0xff]
    %v177 = vld [vmem:[%s38 + $0x58] sm:$0xff]
    %v178 = vld [vmem:[%s38 + $0x60] sm:$0xff]
    %v179 = vld [vmem:[%s38 + $0x68] sm:$0xff]
    %v180 = vld [vmem:[%s38 + $0x70] sm:$0xff]
    %v181 = vld [vmem:[%s38 + $0x78] sm:$0xff]
    %v182 = vld [vmem:[%s38 + $0x80] sm:$0xff]
    %183 = vmatpush.msra.mxu0 %v181
    %184 = vmatpush.msra.mxu0 %v180
    %185 = vmatpush.msra.mxu0 %v179
    %186 = vmatpush.msra.mxu0 %v178
    %187 = vmatpush.msra.mxu0 %v177
    %188 = vmatpush.msra.mxu0 %v176
    %189 = vmatpush.msra.mxu0 %v175
    %190 = vmatpush.msra.mxu0 %v174
    %191 = vmatpush.msra.mxu0 %v173
    %192 = vmatpush.msra.mxu0 %v172
    %193 = vmatpush.msra.mxu0 %v171
    %194 = vmatpush.msra.mxu0 %v170
    %195 = vmatpush.msra.mxu0 %v169
    %196 = vmatpush.msra.mxu0 %v168
    %197 = vmatpush.msra.mxu0 %v167
    %198 = vmatpush.msra.mxu0 %v166
    %199 = vmatmul.f32.gmra.mxu0 %v163
    %v200 = vpop.f32.mrf.mxu0
    %v201 = vadd.f32 0.0, %v200
    %202 = vdwg.mxu0
    %v203 = vrot.slane %v201, 4
    %v204 = vadd.f32 %v201, %v203
    %v205 = vrot.slane %v204, 2
    %v206 = vadd.f32 %v204, %v205
    %v207 = vrot.slane %v206, 1
    %v208 = vadd.f32 %v206, %v207
    %v209 = vmul.f32 %v208, 0.125
    %v210 = vsub.f32 %v201, %v209
    %v211 = vmul.f32 %v210, %v210
    %v212 = vrot.slane %v211, 4
    %v213 = vadd.f32 %v211, %v212
    %v214 = vrot.slane %v213, 2
    %v215 = vadd.f32 %v213, %v214
    %v216 = vrot.slane %v215, 1
    %v217 = vadd.f32 %v215, %v216
    %v218 = vmul.f32 %v217, 0.125
    %v219 = vadd.f32 %v218, 1e-05
    %v220 = vrsqrt.pop %v219
    %v221 = vmul.f32 %v220, %v219
    %v222 = vmul.f32 %v221, %v220
    %v223 = vmul.f32 0.5, %v222
    %v224 = vsub.f32 1.5, %v223
    %v225 = vmul.f32 %v220, %v224
    %vm226 = vweird.f32 %v219
    %vm227 = vweird.f32 %v220
    %vm228 = vmor %vm226, %vm227
    %v229 = vsel %vm228, %v220, %v225
    %v230 = vmul.f32 %v182, %v229
    %v231 = vperm.slane %v230, 0
    %v232 = vmul.f32 %v210, %v231
    %v233 = vperm.slane %v182, 1
    %v234 = vadd.f32 %v232, %v233
    %v235 = vmax.f32 %v234, 0.0
    %v236 = vadd.f32 %v163, %v235
    %s237 = sshll.u32 %s90, 4
    %238 = dma.done %s55, %s237
    %v239 = vld [vmem:[%s54] sm:$0xff]
    %v240 = vld [vmem:[%s54 + $0x8] sm:$0xff]
    %v241 = vld [vmem:[%s54 + $0x10] sm:$0xff]
    %v242 = vld [vmem:[%s54 + $0x18] sm:$0xff]
    %v243 = vld [vmem:[%s54 + $0x20] sm:$0xff]
    %v244 = vld [vmem:[%s54 + $0x28] sm:$0xff]
    %v245 = vld [vmem:[%s54 + $0x30] sm:$0xff]
    %v246 = vld [vmem:[%s54 + $0x38] sm:$0xff]
    %v247 = vld [vmem:[%s54 + $0x40] sm:$0xff]
    %v248 = vld [vmem:[%s54 + $0x48] sm:$0xff]
    %v249 = vld [vmem:[%s54 + $0x50] sm:$0xff]
    %v250 = vld [vmem:[%s54 + $0x58] sm:$0xff]
    %v251 = vld [vmem:[%s54 + $0x60] sm:$0xff]
    %v252 = vld [vmem:[%s54 + $0x68] sm:$0xff]
    %v253 = vld [vmem:[%s54 + $0x70] sm:$0xff]
    %v254 = vld [vmem:[%s54 + $0x78] sm:$0xff]
    %v255 = vld [vmem:[%s54 + $0x80] sm:$0xff]
    %256 = vmatpush.msra.mxu0 %v254
    %257 = vmatpush.msra.mxu0 %v253
    %258 = vmatpush.msra.mxu0 %v252
    %259 = vmatpush.msra.mxu0 %v251
    %260 = vmatpush.msra.mxu0 %v250
    %261 = vmatpush.msra.mxu0 %v249
    %262 = vmatpush.msra.mxu0 %v248
    %263 = vmatpush.msra.mxu0 %v247
    %264 = vmatpush.msra.mxu0 %v246
    %265 = vmatpush.msra.mxu0 %v245
    %266 = vmatpush.msra.mxu0 %v244
    %267 = vmatpush.msra.mxu0 %v243
    %268 = vmatpush.msra.mxu0 %v242
    %269 = vmatpush.msra.mxu0 %v241
    %270 = vmatpush.msra.mxu0 %v240
    %271 = vmatpush.msra.mxu0 %v239
    %272 = vmatmul.f32.gmra.mxu0 %v236
    %v273 = vpop.f32.mrf.mxu0
    %v274 = vadd.f32 0.0, %v273
    %275 = vdwg.mxu0
    %v276 = vrot.slane %v274, 4
    %v277 = vadd.f32 %v274, %v276
    %v278 = vrot.slane %v277, 2
    %v279 = vadd.f32 %v277, %v278
    %v280 = vrot.slane %v279, 1
    %v281 = vadd.f32 %v279, %v280
    %v282 = vmul.f32 %v281, 0.125
    %v283 = vsub.f32 %v274, %v282
    %v284 = vmul.f32 %v283, %v283
    %v285 = vrot.slane %v284, 4
    %v286 = vadd.f32 %v284, %v285
    %v287 = vrot.slane %v286, 2
    %v288 = vadd.f32 %v286, %v287
    %v289 = vrot.slane %v288, 1
    %v290 = vadd.f32 %v288, %v289
    %v291 = vmul.f32 %v290, 0.125
    %v292 = vadd.f32 %v291, 1e-05
    %v293 = vrsqrt.pop %v292
    %v294 = vmul.f32 %v293, %v292
    %v295 = vmul.f32 %v294, %v293
    %v296 = vmul.f32 0.5, %v295
    %v297 = vsub.f32 1.5, %v296
    %v298 = vmul.f32 %v293, %v297
    %vm299 = vweird.f32 %v292
    %vm300 = vweird.f32 %v293
    %vm301 = vmor %vm299, %vm300
    %v302 = vsel %vm301, %v293, %v298
    %v303 = vmul.f32 %v255, %v302
    %v304 = vperm.slane %v303, 0
    %v305 = vmul.f32 %v283, %v304
    %v306 = vperm.slane %v255, 1
    %v307 = vadd.f32 %v305, %v306
    %v308 = vmul.f32 %v307, 0.2
    %v309 = vmax.f32 %v307, %v308
    %s310 = sshll.u32 %s90, 4
    %311 = dma.done %s71, %s310
    %v312 = vld [vmem:[%s70] sm:$0xff]
    %v313 = vld [vmem:[%s70 + $0x8] sm:$0xff]
    %v314 = vld [vmem:[%s70 + $0x10] sm:$0xff]
    %v315 = vld [vmem:[%s70 + $0x18] sm:$0xff]
    %v316 = vld [vmem:[%s70 + $0x20] sm:$0xff]
    %v317 = vld [vmem:[%s70 + $0x28] sm:$0xff]
    %v318 = vld [vmem:[%s70 + $0x30] sm:$0xff]
    %v319 = vld [vmem:[%s70 + $0x38] sm:$0xff]
    %v320 = vld [vmem:[%s70 + $0x40] sm:$0xff]
    %v321 = vld [vmem:[%s70 + $0x48] sm:$0xff]
    %v322 = vld [vmem:[%s70 + $0x50] sm:$0xff]
    %v323 = vld [vmem:[%s70 + $0x58] sm:$0xff]
    %v324 = vld [vmem:[%s70 + $0x60] sm:$0xff]
    %v325 = vld [vmem:[%s70 + $0x68] sm:$0xff]
    %v326 = vld [vmem:[%s70 + $0x70] sm:$0xff]
    %v327 = vld [vmem:[%s70 + $0x78] sm:$0xff]
    %v328 = vld [vmem:[%s70 + $0x80] sm:$0xff]
    %v329 = vperm.slane %v328, 0
    %330 = vmatpush.msra.mxu0 %v327
    %331 = vmatpush.msra.mxu0 %v326
    %332 = vmatpush.msra.mxu0 %v325
    %333 = vmatpush.msra.mxu0 %v324
    %334 = vmatpush.msra.mxu0 %v323
    %335 = vmatpush.msra.mxu0 %v322
    %336 = vmatpush.msra.mxu0 %v321
    %337 = vmatpush.msra.mxu0 %v320
    %338 = vmatpush.msra.mxu0 %v319
    %339 = vmatpush.msra.mxu0 %v318
    %340 = vmatpush.msra.mxu0 %v317
    %341 = vmatpush.msra.mxu0 %v316
    %342 = vmatpush.msra.mxu0 %v315
    %343 = vmatpush.msra.mxu0 %v314
    %344 = vmatpush.msra.mxu0 %v313
    %345 = vmatpush.msra.mxu0 %v312
    %346 = vmatmul.f32.gmra.mxu0 %v309
    %v347 = vpop.f32.mrf.mxu0
    %v348 = vadd.f32 %v329, %v347
    %349 = vdwg.mxu0
    %350 = vst [vmem:[#allocation8] sm:$0xff] %v348
    %351 = vst [vmem:[#allocation8 + $0x8] sm:$0xff] %v309
    // Predicated region
    $region26: #{tpu_custom_call.1} parent=1 // pred_check
      _
    $region27: #{tpu_custom_call.1} parent=1 // pred_check_branch
      %353 = sbr.rel (0) target = $region29
    $region28: #{tpu_custom_call.1} parent=1 // pred_region
      %355 = vsyncadd [#allocation7], 0
      %s357 = sshll.u32 [#allocation8], 4
      %s358 = int_to_ptr.vmem [resolvable:$true] %s357
      %s359 = sshll.u32 %s2, 4
      %s360 = int_to_ptr.hbm [resolvable:$true] %s359
      %362 = dma.vmem_to_hbm [thread:$0]  %s358, 256, %s360, [#allocation7]
    $region29: #{tpu_custom_call.1} parent=1 // pred_fallthru
      _
    // Predicated region
    $region30: #{tpu_custom_call.1} parent=1 // pred_check
      _
    $region31: #{tpu_custom_call.1} parent=1 // pred_check_branch
      %364 = sbr.rel (0) target = $region33
    $region32: #{tpu_custom_call.1} parent=1 // pred_region
      %366 = dma.done [#allocation7], 256
    $region33: #{tpu_custom_call.1} parent=1 // pred_fallthru
      _
    %367 = vsyncpa [#allocation6], 1
    %368 = vsyncpa [#allocation7], 1
  %369 = vsyncmov [#allocation4]
  %s370 = vpop.sfrf %369
  %p371 = scmp.eq.s32.totalorder %s370, 0
  %p372 = pneg %p371
  %374 = shalt.err (%p372)
  %s375 = scalar_lea.sflag [#allocation4], 1
  %376 = vsyncmov %s375
  %s377 = vpop.sfrf %376
  %p378 = scmp.eq.s32.totalorder %s377, 0
  %p379 = pneg %p378
  %381 = shalt.err (%p379)
  %s382 = scalar_lea.sflag [#allocation4], 2
  %383 = vsyncmov %s382
  %s384 = vpop.sfrf %383
  %p385 = scmp.eq.s32.totalorder %s384, 0
  %p386 = pneg %p385
  %388 = shalt.err (%p386)
  %s389 = scalar_lea.sflag [#allocation4], 3
  %390 = vsyncmov %s389
  %s391 = vpop.sfrf %390
  %p392 = scmp.eq.s32.totalorder %s391, 0
  %p393 = pneg %p392
  %395 = shalt.err (%p393)

</llo_original>
